<compile_context>
chip_gen: v6e
topology: v6e:2x2x1
jax: 0.10.0
libtpu: 0.0.40
codegen_flags: <defaults>
</compile_context>

<pallas_src>
from typing import NamedTuple, Optional

import jax
import jax.numpy as jnp
from jax.experimental import pallas as pl
from jax.experimental.pallas import tpu as pltpu


def _round_up(n, m):
    return ((n + m - 1) // m) * m


def _vmem_limit_bytes():
    """Generation-aware VMEM limit: ~3/4 of physical, capped (96 MiB v5e/v6e, 48 MiB v7x)."""
    cap = 128 << 20
    try:
        cap = int(pltpu.get_tpu_info().vmem_capacity_bytes)
    except Exception:
        pass
    return int(min(max((cap * 3) // 4, 32 << 20), 96 << 20))


def _pick_tp(P):
    """Lane tile: multiple of 128 that minimizes padding of P (ties -> bigger tile)."""
    best_t, best_pp = 128, _round_up(P, 128)
    for t in (512, 384, 256):
        pp = _round_up(P, t)
        if pp < best_pp or (pp == best_pp and t > best_t):
            best_t, best_pp = t, pp
    return best_t


def _required_vmem_bytes(CK, TO, TP, has_bias, itemsize=4):
    """ALL live blocks, double-buffered: x(1,CK,TP) + W(CK,TO,TP) + out(1,TO,TP) [+ bias]."""
    per_step = CK * TP + CK * TO * TP + TO * TP + (TO * TP if has_bias else 0)
    return 2 * per_step * itemsize


def _pick_tiles(P, Op, CK, has_bias, vmem_budget):
    TP = _pick_tp(P)
    while True:
        # Cap the f32 accumulator at <= 64 KiB (16 vregs) to stay far from spills.
        acc_cap = max(8, (64 * 1024) // (4 * TP))
        cands = sorted((t for t in range(8, Op + 1, 8) if Op % t == 0 and t <= acc_cap),
                       reverse=True)
        for TO in cands:
            if _required_vmem_bytes(CK, TO, TP, has_bias) <= vmem_budget:
                return TP, TO
        if TP > 128:
            TP = {512: 256, 384: 256, 256: 128}.get(TP, 128)   # shrink lane tile and retry
        else:
            # Fallback: SMALLEST tile (not the largest, as before).
            return TP, cands[-1]


class Loc1dPrepared(NamedTuple):
    Wf: jax.Array                # (CK, Op, Pp) f32, (C*K)^-0.5 folded in
    bias: Optional[jax.Array]    # (Op, Pp) f32 or None
    C: int
    K: int
    O: int
    P: int
    Op: int
    Pp: int
    TP: int
    TO: int
    vmem_limit: int


def my_loc1d_prepare(W, bias=None):
    """One-time parameter re-layout + tile selection.

    Hoisted out of the per-call path so repeated forward calls never re-transpose the
    dominant weight tensor in HBM; the (C*K)^-0.5 scale is folded into the weights.
    """
    O, C, P, K = W.shape
    CK = C * K
    has_bias = bias is not None
    scale = float(CK) ** -0.5

    vmem_limit = _vmem_limit_bytes()
    Op = _round_up(O, 8)
    TP, TO = _pick_tiles(P, Op, CK, has_bias, (vmem_limit * 3) // 4)
    Pp = _round_up(P, TP)

    # Wf[c*K + k, o, p] = W[o, c, p, k] * scale, zero-padded to (CK, Op, Pp).
    Wf = (jnp.transpose(W, (1, 3, 0, 2)).reshape(CK, O, P) * scale).astype(jnp.float32)
    Wf = jnp.pad(Wf, ((0, 0), (0, Op - O), (0, Pp - P)))
    b2 = None
    if has_bias:
        b2 = jnp.pad(bias.reshape(O, P).astype(jnp.float32), ((0, Op - O), (0, Pp - P)))
    return Loc1dPrepared(Wf, b2, C, K, O, P, Op, Pp, TP, TO, vmem_limit)


def _make_kernel(CK, has_bias, unroll_threshold=32):
    """Block shapes seen by the kernel (B squeezed out):
         x_ref   : (CK, TP)   w_ref : (CK, TO, TP)   bias_ref : (TO, TP)   o_ref : (TO, TP)
    """

    def kernel(*refs):
        if has_bias:
            x_ref, w_ref, bias_ref, o_ref = refs
        else:
            x_ref, w_ref, o_ref = refs
            bias_ref = None

        def tap(i, acc):
            # Only the current weight tap (TO, TP) and one x row (1, TP) are live per step;
            # the (1, TP) -> (TO, TP) sublane broadcast is fused into the multiply.
            w_i = w_ref[i].astype(jnp.float32)              # (TO, TP)
            x_i = x_ref[pl.ds(i, 1), :].astype(jnp.float32)  # (1, TP)
            return acc + w_i * x_i

        # Bias folded into the accumulator init (out = sum(w*scale*x) + bias).
        acc0 = (bias_ref[...].astype(jnp.float32) if has_bias
                else jnp.zeros(o_ref.shape, jnp.float32))

        if CK <= unroll_threshold:
            acc = acc0
            for i in range(CK):
                acc = tap(i, acc)
        else:
            acc = jax.lax.fori_loop(0, CK, tap, acc0, unroll=8)

        o_ref[...] = acc.astype(o_ref.dtype)

    return kernel


def my_loc1d_apply(x, prep: Loc1dPrepared, *, stride=1):
    """Forward pass with pre-laid-out parameters (prep from my_loc1d_prepare)."""
    B, C, L = x.shape
    assert C == prep.C
    P, K = prep.P, prep.K
    CK = prep.C * prep.K
    assert P == (L - K) // stride + 1
    TP, TO, Op, Pp = prep.TP, prep.TO, prep.Op, prep.Pp
    has_bias = prep.bias is not None

    # im2col (plain XLA, once per call): xp[b, c*K + k, p] = x[b, c, p*stride + k]
    cols = [x[:, :, k: k + (P - 1) * stride + 1: stride] for k in range(K)]  # K x (B, C, P)
    xp = jnp.stack(cols, axis=2).reshape(B, CK, P).astype(jnp.float32)
    xp = jnp.pad(xp, ((0, 0), (0, 0), (0, Pp - P)))

    grid = (Pp // TP, Op // TO, B)   # B innermost: W/bias blocks stay VMEM-resident across B

    in_specs = [
        pl.BlockSpec((None, CK, TP), lambda pt, ot, b: (b, 0, pt)),   # xp
        pl.BlockSpec((CK, TO, TP), lambda pt, ot, b: (0, ot, pt)),    # Wf (index ignores b)
    ]
    operands = [xp, prep.Wf]
    if has_bias:
        in_specs.append(pl.BlockSpec((TO, TP), lambda pt, ot, b: (ot, pt)))
        operands.append(prep.bias)

    out = pl.pallas_call(
        _make_kernel(CK, has_bias),
        out_shape=jax.ShapeDtypeStruct((B, Op, Pp), x.dtype),
        grid=grid,
        in_specs=in_specs,
        out_specs=pl.BlockSpec((None, TO, TP), lambda pt, ot, b: (b, ot, pt)),
        compiler_params=pltpu.CompilerParams(
            dimension_semantics=("parallel", "parallel", "parallel"),
            vmem_limit_bytes=prep.vmem_limit,
        ),
    )(*operands)
    return out[:, :prep.O, :prep.P]


def my_loc1d_forward(x, W, bias=None, *, stride=1):
    """Convenience wrapper (prepare + apply). For repeated calls, cache my_loc1d_prepare."""
    return my_loc1d_apply(x, my_loc1d_prepare(W, bias), stride=stride)


def my_loc1d_reference(x, W, bias=None, *, stride=1):
    """Pure-JAX reference mirroring the PyTorch forward exactly."""
    B, C, L = x.shape
    O, _, P, K = W.shape
    patches = jnp.stack(
        [x[:, :, p * stride:p * stride + K] for p in range(P)], axis=2
    )  # (B, C, P, K)
    out = jnp.einsum('bcpk,ocpk->bop', patches, W) * (C * K) ** (-0.5)
    if bias is not None:
        out = out + bias
    return out


if __name__ == "__main__":
    key = jax.random.PRNGKey(0)

    # Config 1: stride=1, with bias.
    B, C_in, L, O, K, stride = 2, 4, 16, 8, 3, 1
    P = (L - K) // stride + 1  # 14
    kx, kw, kb, key = jax.random.split(key, 4)
    x = jax.random.normal(kx, (B, C_in, L), dtype=jnp.float32)
    W = jax.random.normal(kw, (O, C_in, P, K), dtype=jnp.float32)
    bias = jax.random.normal(kb, (1, O, P), dtype=jnp.float32)

    prep = my_loc1d_prepare(W, bias)   # one-time re-layout (cache across calls)
    out = jax.block_until_ready(my_loc1d_apply(x, prep, stride=stride))
    ref = my_loc1d_reference(x, W, bias, stride=stride)
    assert out.shape == (B, O, P), out.shape
    assert jnp.allclose(out, ref, rtol=1e-5, atol=1e-5), float(jnp.max(jnp.abs(out - ref)))

    # Config 2: stride=2, no bias, O not a multiple of 8 (exercises O/P padding + im2col stride).
    stride2, K2, O2 = 2, 3, 6
    P2 = (L - K2) // stride2 + 1  # 7
    kx2, kw2 = jax.random.split(key, 2)
    x2 = jax.random.normal(kx2, (B, C_in, L), dtype=jnp.float32)
    W2 = jax.random.normal(kw2, (O2, C_in, P2, K2), dtype=jnp.float32)
    out2 = jax.block_until_ready(my_loc1d_forward(x2, W2, None, stride=stride2))
    ref2 = my_loc1d_reference(x2, W2, None, stride=stride2)
    assert out2.shape == (B, O2, P2), out2.shape
    assert jnp.allclose(out2, ref2, rtol=1e-5, atol=1e-5), float(jnp.max(jnp.abs(out2 - ref2)))

    print("KERNEL_OK")
</pallas_src>

<mosaic_0001>
module attributes {stable_mosaic.version = 11 : i64} {
  func.func @kernel(%arg0: i32, %arg1: i32, %arg2: i32, %arg3: memref<1x12x128xf32, #tpu.memory_space<vmem>>, %arg4: memref<12x8x128xf32, #tpu.memory_space<vmem>>, %arg5: memref<8x128xf32, #tpu.memory_space<vmem>>, %arg6: memref<1x8x128xf32, #tpu.memory_space<vmem>>) attributes {dimension_semantics = [#tpu.dimension_semantics<parallel>, #tpu.dimension_semantics<parallel>, #tpu.dimension_semantics<parallel>], iteration_bounds = array<i64: 1, 1, 2>, scalar_prefetch = 0 : i64, scratch_operands = 0 : i64, tpu.core_type = #tpu.core_type<tc>, window_params = [{transform_indices = @transform_0, window_bounds = array<i64: 1, 12, 128>}, {transform_indices = @transform_1, window_bounds = array<i64: 12, 8, 128>}, {transform_indices = @transform_2, window_bounds = array<i64: 8, 128>}, {transform_indices = @transform_3, window_bounds = array<i64: 1, 8, 128>}]} {
    %c0 = arith.constant 0 : index
    %c0_0 = arith.constant 0 : index
    %0 = vector.load %arg5[%c0, %c0_0] : memref<8x128xf32, #tpu.memory_space<vmem>>, vector<8x128xf32>
    %c0_1 = arith.constant 0 : index
    %c0_2 = arith.constant 0 : index
    %c0_3 = arith.constant 0 : index
    %1 = vector.load %arg4[%c0_1, %c0_2, %c0_3] : memref<12x8x128xf32, #tpu.memory_space<vmem>>, vector<1x8x128xf32>
    %2 = vector.shape_cast %1 : vector<1x8x128xf32> to vector<8x128xf32>
    %c0_4 = arith.constant 0 : index
    %c0_5 = arith.constant 0 : index
    %c0_6 = arith.constant 0 : index
    %3 = vector.load %arg3[%c0_4, %c0_5, %c0_6] : memref<1x12x128xf32, #tpu.memory_space<vmem>>, vector<1x1x128xf32>
    %4 = vector.shape_cast %3 : vector<1x1x128xf32> to vector<1x128xf32>
    %5 = vector.broadcast %4 : vector<1x128xf32> to vector<8x128xf32>
    %6 = arith.mulf %2, %5 : vector<8x128xf32>
    %7 = arith.addf %0, %6 : vector<8x128xf32>
    %c1 = arith.constant 1 : index
    %c0_7 = arith.constant 0 : index
    %c0_8 = arith.constant 0 : index
    %8 = vector.load %arg4[%c1, %c0_7, %c0_8] : memref<12x8x128xf32, #tpu.memory_space<vmem>>, vector<1x8x128xf32>
    %9 = vector.shape_cast %8 : vector<1x8x128xf32> to vector<8x128xf32>
    %c0_9 = arith.constant 0 : index
    %c1_10 = arith.constant 1 : index
    %c0_11 = arith.constant 0 : index
    %10 = vector.load %arg3[%c0_9, %c1_10, %c0_11] : memref<1x12x128xf32, #tpu.memory_space<vmem>>, vector<1x1x128xf32>
    %11 = vector.shape_cast %10 : vector<1x1x128xf32> to vector<1x128xf32>
    %12 = vector.broadcast %11 : vector<1x128xf32> to vector<8x128xf32>
    %13 = arith.mulf %9, %12 : vector<8x128xf32>
    %14 = arith.addf %7, %13 : vector<8x128xf32>
    %c2 = arith.constant 2 : index
    %c0_12 = arith.constant 0 : index
    %c0_13 = arith.constant 0 : index
    %15 = vector.load %arg4[%c2, %c0_12, %c0_13] : memref<12x8x128xf32, #tpu.memory_space<vmem>>, vector<1x8x128xf32>
    %16 = vector.shape_cast %15 : vector<1x8x128xf32> to vector<8x128xf32>
    %c0_14 = arith.constant 0 : index
    %c2_15 = arith.constant 2 : index
    %c0_16 = arith.constant 0 : index
    %17 = vector.load %arg3[%c0_14, %c2_15, %c0_16] : memref<1x12x128xf32, #tpu.memory_space<vmem>>, vector<1x1x128xf32>
    %18 = vector.shape_cast %17 : vector<1x1x128xf32> to vector<1x128xf32>
    %19 = vector.broadcast %18 : vector<1x128xf32> to vector<8x128xf32>
    %20 = arith.mulf %16, %19 : vector<8x128xf32>
    %21 = arith.addf %14, %20 : vector<8x128xf32>
    %c3 = arith.constant 3 : index
    %c0_17 = arith.constant 0 : index
    %c0_18 = arith.constant 0 : index
    %22 = vector.load %arg4[%c3, %c0_17, %c0_18] : memref<12x8x128xf32, #tpu.memory_space<vmem>>, vector<1x8x128xf32>
    %23 = vector.shape_cast %22 : vector<1x8x128xf32> to vector<8x128xf32>
    %c0_19 = arith.constant 0 : index
    %c3_20 = arith.constant 3 : index
    %c0_21 = arith.constant 0 : index
    %24 = vector.load %arg3[%c0_19, %c3_20, %c0_21] : memref<1x12x128xf32, #tpu.memory_space<vmem>>, vector<1x1x128xf32>
    %25 = vector.shape_cast %24 : vector<1x1x128xf32> to vector<1x128xf32>
    %26 = vector.broadcast %25 : vector<1x128xf32> to vector<8x128xf32>
    %27 = arith.mulf %23, %26 : vector<8x128xf32>
    %28 = arith.addf %21, %27 : vector<8x128xf32>
    %c4 = arith.constant 4 : index
    %c0_22 = arith.constant 0 : index
    %c0_23 = arith.constant 0 : index
    %29 = vector.load %arg4[%c4, %c0_22, %c0_23] : memref<12x8x128xf32, #tpu.memory_space<vmem>>, vector<1x8x128xf32>
    %30 = vector.shape_cast %29 : vector<1x8x128xf32> to vector<8x128xf32>
    %c0_24 = arith.constant 0 : index
    %c4_25 = arith.constant 4 : index
    %c0_26 = arith.constant 0 : index
    %31 = vector.load %arg3[%c0_24, %c4_25, %c0_26] : memref<1x12x128xf32, #tpu.memory_space<vmem>>, vector<1x1x128xf32>
    %32 = vector.shape_cast %31 : vector<1x1x128xf32> to vector<1x128xf32>
    %33 = vector.broadcast %32 : vector<1x128xf32> to vector<8x128xf32>
    %34 = arith.mulf %30, %33 : vector<8x128xf32>
    %35 = arith.addf %28, %34 : vector<8x128xf32>
    %c5 = arith.constant 5 : index
    %c0_27 = arith.constant 0 : index
    %c0_28 = arith.constant 0 : index
    %36 = vector.load %arg4[%c5, %c0_27, %c0_28] : memref<12x8x128xf32, #tpu.memory_space<vmem>>, vector<1x8x128xf32>
    %37 = vector.shape_cast %36 : vector<1x8x128xf32> to vector<8x128xf32>
    %c0_29 = arith.constant 0 : index
    %c5_30 = arith.constant 5 : index
    %c0_31 = arith.constant 0 : index
    %38 = vector.load %arg3[%c0_29, %c5_30, %c0_31] : memref<1x12x128xf32, #tpu.memory_space<vmem>>, vector<1x1x128xf32>
    %39 = vector.shape_cast %38 : vector<1x1x128xf32> to vector<1x128xf32>
    %40 = vector.broadcast %39 : vector<1x128xf32> to vector<8x128xf32>
    %41 = arith.mulf %37, %40 : vector<8x128xf32>
    %42 = arith.addf %35, %41 : vector<8x128xf32>
    %c6 = arith.constant 6 : index
    %c0_32 = arith.constant 0 : index
    %c0_33 = arith.constant 0 : index
    %43 = vector.load %arg4[%c6, %c0_32, %c0_33] : memref<12x8x128xf32, #tpu.memory_space<vmem>>, vector<1x8x128xf32>
    %44 = vector.shape_cast %43 : vector<1x8x128xf32> to vector<8x128xf32>
    %c0_34 = arith.constant 0 : index
    %c6_35 = arith.constant 6 : index
    %c0_36 = arith.constant 0 : index
    %45 = vector.load %arg3[%c0_34, %c6_35, %c0_36] : memref<1x12x128xf32, #tpu.memory_space<vmem>>, vector<1x1x128xf32>
    %46 = vector.shape_cast %45 : vector<1x1x128xf32> to vector<1x128xf32>
    %47 = vector.broadcast %46 : vector<1x128xf32> to vector<8x128xf32>
    %48 = arith.mulf %44, %47 : vector<8x128xf32>
    %49 = arith.addf %42, %48 : vector<8x128xf32>
    %c7 = arith.constant 7 : index
    %c0_37 = arith.constant 0 : index
    %c0_38 = arith.constant 0 : index
    %50 = vector.load %arg4[%c7, %c0_37, %c0_38] : memref<12x8x128xf32, #tpu.memory_space<vmem>>, vector<1x8x128xf32>
    %51 = vector.shape_cast %50 : vector<1x8x128xf32> to vector<8x128xf32>
    %c0_39 = arith.constant 0 : index
    %c7_40 = arith.constant 7 : index
    %c0_41 = arith.constant 0 : index
    %52 = vector.load %arg3[%c0_39, %c7_40, %c0_41] : memref<1x12x128xf32, #tpu.memory_space<vmem>>, vector<1x1x128xf32>
    %53 = vector.shape_cast %52 : vector<1x1x128xf32> to vector<1x128xf32>
    %54 = vector.broadcast %53 : vector<1x128xf32> to vector<8x128xf32>
    %55 = arith.mulf %51, %54 : vector<8x128xf32>
    %56 = arith.addf %49, %55 : vector<8x128xf32>
    %c8 = arith.constant 8 : index
    %c0_42 = arith.constant 0 : index
    %c0_43 = arith.constant 0 : index
    %57 = vector.load %arg4[%c8, %c0_42, %c0_43] : memref<12x8x128xf32, #tpu.memory_space<vmem>>, vector<1x8x128xf32>
    %58 = vector.shape_cast %57 : vector<1x8x128xf32> to vector<8x128xf32>
    %c0_44 = arith.constant 0 : index
    %c8_45 = arith.constant 8 : index
    %c0_46 = arith.constant 0 : index
    %59 = vector.load %arg3[%c0_44, %c8_45, %c0_46] : memref<1x12x128xf32, #tpu.memory_space<vmem>>, vector<1x1x128xf32>
    %60 = vector.shape_cast %59 : vector<1x1x128xf32> to vector<1x128xf32>
    %61 = vector.broadcast %60 : vector<1x128xf32> to vector<8x128xf32>
    %62 = arith.mulf %58, %61 : vector<8x128xf32>
    %63 = arith.addf %56, %62 : vector<8x128xf32>
    %c9 = arith.constant 9 : index
    %c0_47 = arith.constant 0 : index
    %c0_48 = arith.constant 0 : index
    %64 = vector.load %arg4[%c9, %c0_47, %c0_48] : memref<12x8x128xf32, #tpu.memory_space<vmem>>, vector<1x8x128xf32>
    %65 = vector.shape_cast %64 : vector<1x8x128xf32> to vector<8x128xf32>
    %c0_49 = arith.constant 0 : index
    %c9_50 = arith.constant 9 : index
    %c0_51 = arith.constant 0 : index
    %66 = vector.load %arg3[%c0_49, %c9_50, %c0_51] : memref<1x12x128xf32, #tpu.memory_space<vmem>>, vector<1x1x128xf32>
    %67 = vector.shape_cast %66 : vector<1x1x128xf32> to vector<1x128xf32>
    %68 = vector.broadcast %67 : vector<1x128xf32> to vector<8x128xf32>
    %69 = arith.mulf %65, %68 : vector<8x128xf32>
    %70 = arith.addf %63, %69 : vector<8x128xf32>
    %c10 = arith.constant 10 : index
    %c0_52 = arith.constant 0 : index
    %c0_53 = arith.constant 0 : index
    %71 = vector.load %arg4[%c10, %c0_52, %c0_53] : memref<12x8x128xf32, #tpu.memory_space<vmem>>, vector<1x8x128xf32>
    %72 = vector.shape_cast %71 : vector<1x8x128xf32> to vector<8x128xf32>
    %c0_54 = arith.constant 0 : index
    %c10_55 = arith.constant 10 : index
    %c0_56 = arith.constant 0 : index
    %73 = vector.load %arg3[%c0_54, %c10_55, %c0_56] : memref<1x12x128xf32, #tpu.memory_space<vmem>>, vector<1x1x128xf32>
    %74 = vector.shape_cast %73 : vector<1x1x128xf32> to vector<1x128xf32>
    %75 = vector.broadcast %74 : vector<1x128xf32> to vector<8x128xf32>
    %76 = arith.mulf %72, %75 : vector<8x128xf32>
    %77 = arith.addf %70, %76 : vector<8x128xf32>
    %c11 = arith.constant 11 : index
    %c0_57 = arith.constant 0 : index
    %c0_58 = arith.constant 0 : index
    %78 = vector.load %arg4[%c11, %c0_57, %c0_58] : memref<12x8x128xf32, #tpu.memory_space<vmem>>, vector<1x8x128xf32>
    %79 = vector.shape_cast %78 : vector<1x8x128xf32> to vector<8x128xf32>
    %c0_59 = arith.constant 0 : index
    %c11_60 = arith.constant 11 : index
    %c0_61 = arith.constant 0 : index
    %80 = vector.load %arg3[%c0_59, %c11_60, %c0_61] : memref<1x12x128xf32, #tpu.memory_space<vmem>>, vector<1x1x128xf32>
    %81 = vector.shape_cast %80 : vector<1x1x128xf32> to vector<1x128xf32>
    %82 = vector.broadcast %81 : vector<1x128xf32> to vector<8x128xf32>
    %83 = arith.mulf %79, %82 : vector<8x128xf32>
    %84 = arith.addf %77, %83 : vector<8x128xf32>
    %c0_62 = arith.constant 0 : index
    %c0_63 = arith.constant 0 : index
    %c0_64 = arith.constant 0 : index
    %85 = vector.load %arg6[%c0_62, %c0_63, %c0_64] : memref<1x8x128xf32, #tpu.memory_space<vmem>>, vector<1x8x128xf32>
    %86 = vector.shape_cast %85 : vector<1x8x128xf32> to vector<8x128xf32>
    %87 = vector.shape_cast %84 : vector<8x128xf32> to vector<1x8x128xf32>
    tpu.vector_store %arg6[%c0_62, %c0_63, %c0_64], %87 {strides = array<i32>} : memref<1x8x128xf32, #tpu.memory_space<vmem>>, vector<1x8x128xf32>,
    return
  }
  func.func @transform_0(%arg0: i32, %arg1: i32, %arg2: i32) -> (i32, i32, i32) {
    %c0_i32 = arith.constant 0 : i32
    %c0_i32_0 = arith.constant 0 : i32
    return %arg2, %c0_i32, %arg0 : i32, i32, i32
  }
  func.func @transform_1(%arg0: i32, %arg1: i32, %arg2: i32) -> (i32, i32, i32) {
    %c0_i32 = arith.constant 0 : i32
    %c0_i32_0 = arith.constant 0 : i32
    return %c0_i32, %arg1, %arg0 : i32, i32, i32
  }
  func.func @transform_2(%arg0: i32, %arg1: i32, %arg2: i32) -> (i32, i32) {
    %c0_i32 = arith.constant 0 : i32
    return %arg1, %arg0 : i32, i32
  }
  func.func @transform_3(%arg0: i32, %arg1: i32, %arg2: i32) -> (i32, i32, i32) {
    %c0_i32 = arith.constant 0 : i32
    return %arg2, %arg1, %arg0 : i32, i32, i32
  }
}

</mosaic_0001>

<llo_original>
// kernel: tpu_custom_call.1
$region0: #{tpu_custom_call.1}
  #allocation0 [shape = 'u32[]', space=smem, size = 0x4, offset = 0x4, fixed_abs, tag = 'smem constant byte address 0x4 - core index']
  #allocation1 [shape = 'u32[144,128]{1,0:T(1,128)}', space=vmem, size = 0x12000, scoped, tag = 'internal scratch']
  %s0 = inlined_call_operand.vmem [shape: f32[2,12,128], index: 0, kind: input, shape index: {}]
  %s1 = inlined_call_operand.hbm [shape: f32[12,8,128], index: 1, kind: input, shape index: {}]
  %s2 = inlined_call_operand.vmem [shape: f32[8,128], index: 2, kind: input, shape index: {}]
  %s3 = inlined_call_operand.hbm [shape: f32[2,8,128], index: 3, kind: output, shape index: {}]
  %s4 = sld [smem:[#allocation0]]
  $region49: #{tpu_custom_call.1} parent=0
    _
  %s6 = ssub.s32 1, %s4
  %s7 = scalar_select 0, %s6, %s4
  $region1: #{tpu_custom_call.1} parent=0
    #allocation2 [shape = 'u8[49152]{0}', space=vmem, size = 0xc000, scoped, tag = 'input window, operand 1, single buffered']
    #allocation3 [shape = 's32[2]{0}', space=sflag, size = 0x8, scoped, tag = 'scoped memory for tpu_custom_call.1']
    #allocation4 [shape = 's32[2]{0}', space=sflag, size = 0x8, scoped, tag = 'scoped memory for tpu_custom_call.1']
    #allocation5 [shape = 'u8[8192]{0}', space=vmem, size = 0x2000, scoped, tag = 'output window, operand 0']
    %8 = vsyncpa [#allocation3], 0
    %9 = vsyncpa [#allocation4], 0
    %s10 = scalar_lea.sflag [#allocation4], 1
    %11 = vsyncpa %s10, 0
    loop: start=0, step=1, limit=4
    $region2: #{tpu_custom_call.1} parent=1 // loop_pre_header
      _
    $region3: #{tpu_custom_call.1} parent=1 // loop_header
      %s13 = sphi 0, %s17
      %p14 = scmp.ge.s32.totalorder %s13, 4
      %s20 = sphi 0, %s39
      %s21 = sphi 0, %s35
      %s22 = sphi 0, %s31
      %s23 = sphi 0, %s20
      %s24 = sphi 0, %s21
      %s25 = sphi 0, %s22
      %s26 = sphi 0, %s23
      %s27 = sphi 0, %s24
      %s28 = sphi 0, %s25
      %s44 = sphi 0, %s46
      %s47 = sphi 0, %s44
      %s48 = sphi 0, %s47
      %s64 = sphi 0, %s48
      %s72 = sphi 0, %s74
      %s75 = sphi 0, %s72
      %s76 = sphi 0, %s75
      %s92 = sphi 0, %s76
      %s100 = sphi 0, %s102
      %s103 = sphi 0, %s100
      %s104 = sphi 0, %s103
      %s120 = sphi 0, %s104
      %s130 = sphi 0, %s132
      %s133 = sphi 0, %s130
      %s134 = sphi 0, %s133
      %s150 = sphi 0, %s134
    $region4: #{tpu_custom_call.1} parent=1 // loop_header_branch
      %16 = sbr.rel (%p14) target = $region8
    $region5: #{tpu_custom_call.1} parent=1 // loop_body
      %s18 = ssub.s32 %s13, 1
      %s19 = ssub.s32 %s13, 2
      %s29 = sadd.s32 1, %s22
      %p30 = scmp.ge.s32.totalorder %s29, 2
      %s31 = scalar_select %p30, 0, %s29
      %s32 = sadd.s32 1, %s21
      %s33 = scalar_select %p30, %s32, %s21
      %p34 = scmp.ge.s32.totalorder %s33, 1
      %s35 = scalar_select %p34, 0, %s33
      %s36 = sadd.s32 1, %s20
      %s37 = scalar_select %p34, %s36, %s20
      %p38 = scmp.ge.s32.totalorder %s37, 1
      %s39 = scalar_select %p38, 0, %s37
      %s40 = ssub.s32 %s22, %s31
      %s41 = ssub.s32 %s20, %s39
      %s42 = sor.u32 %s40, %s41
      %p43 = scmp.eq.s32.totalorder %s42, 0
      %s45 = sadd.s32 %s44, 1
      %s46 = scalar_select %p43, %s44, %s45
      %p49 = pneg %p43
      %p50 = scmp.eq.s32.totalorder %s13, 1
      %p51 = por %p49, %p50
      %p52 = scmp.ne.s32.totalorder %s44, %s47
      %p53 = scmp.eq.s32.totalorder %s13, 0
      %p54 = por %p52, %p53
      %p55 = scmp.ne.s32.totalorder %s44, %s47
      %p56 = scmp.eq.s32.totalorder %s18, 1
      %p57 = por %p55, %p56
      %p58 = scmp.ne.s32.totalorder %s47, %s48
      %p59 = scmp.eq.s32.totalorder %s18, 0
      %p60 = por %p58, %p59
      %p61 = scmp.ne.s32.totalorder %s47, %s48
      %p62 = scmp.eq.s32.totalorder %s19, 1
      %p63 = por %p61, %p62
      %p65 = scmp.ne.s32.totalorder %s48, %s64
      %p66 = scmp.eq.s32.totalorder %s19, 0
      %p67 = por %p65, %p66
      %s68 = ssub.s32 %s21, %s35
      %s69 = ssub.s32 %s20, %s39
      %s70 = sor.u32 %s68, %s69
      %p71 = scmp.eq.s32.totalorder %s70, 0
      %s73 = sadd.s32 %s72, 1
      %s74 = scalar_select %p71, %s72, %s73
      %p77 = pneg %p71
      %p78 = scmp.eq.s32.totalorder %s13, 1
      %p79 = por %p77, %p78
      %p80 = scmp.ne.s32.totalorder %s72, %s75
      %p81 = scmp.eq.s32.totalorder %s13, 0
      %p82 = por %p80, %p81
      %p83 = scmp.ne.s32.totalorder %s72, %s75
      %p84 = scmp.eq.s32.totalorder %s18, 1
      %p85 = por %p83, %p84
      %p86 = scmp.ne.s32.totalorder %s75, %s76
      %p87 = scmp.eq.s32.totalorder %s18, 0
      %p88 = por %p86, %p87
      %p89 = scmp.ne.s32.totalorder %s75, %s76
      %p90 = scmp.eq.s32.totalorder %s19, 1
      %p91 = por %p89, %p90
      %p93 = scmp.ne.s32.totalorder %s76, %s92
      %p94 = scmp.eq.s32.totalorder %s19, 0
      %p95 = por %p93, %p94
      %s96 = ssub.s32 %s21, %s35
      %s97 = ssub.s32 %s20, %s39
      %s98 = sor.u32 %s96, %s97
      %p99 = scmp.eq.s32.totalorder %s98, 0
      %s101 = sadd.s32 %s100, 1
      %s102 = scalar_select %p99, %s100, %s101
      %p105 = pneg %p99
      %p106 = scmp.eq.s32.totalorder %s13, 1
      %p107 = por %p105, %p106
      %p108 = scmp.ne.s32.totalorder %s100, %s103
      %p109 = scmp.eq.s32.totalorder %s13, 0
      %p110 = por %p108, %p109
      %p111 = scmp.ne.s32.totalorder %s100, %s103
      %p112 = scmp.eq.s32.totalorder %s18, 1
      %p113 = por %p111, %p112
      %p114 = scmp.ne.s32.totalorder %s103, %s104
      %p115 = scmp.eq.s32.totalorder %s18, 0
      %p116 = por %p114, %p115
      %p117 = scmp.ne.s32.totalorder %s103, %s104
      %p118 = scmp.eq.s32.totalorder %s19, 1
      %p119 = por %p117, %p118
      %p121 = scmp.ne.s32.totalorder %s104, %s120
      %p122 = scmp.eq.s32.totalorder %s19, 0
      %p123 = por %p121, %p122
      %s124 = ssub.s32 %s22, %s31
      %s125 = ssub.s32 %s21, %s35
      %s126 = sor.u32 %s124, %s125
      %s127 = ssub.s32 %s20, %s39
      %s128 = sor.u32 %s126, %s127
      %p129 = scmp.eq.s32.totalorder %s128, 0
      %s131 = sadd.s32 %s130, 1
      %s132 = scalar_select %p129, %s130, %s131
      %p135 = pneg %p129
      %p136 = scmp.eq.s32.totalorder %s13, 1
      %p137 = por %p135, %p136
      %p138 = scmp.ne.s32.totalorder %s130, %s133
      %p139 = scmp.eq.s32.totalorder %s13, 0
      %p140 = por %p138, %p139
      %p141 = scmp.ne.s32.totalorder %s130, %s133
      %p142 = scmp.eq.s32.totalorder %s18, 1
      %p143 = por %p141, %p142
      %p144 = scmp.ne.s32.totalorder %s133, %s134
      %p145 = scmp.eq.s32.totalorder %s18, 0
      %p146 = por %p144, %p145
      %p147 = scmp.ne.s32.totalorder %s133, %s134
      %p148 = scmp.eq.s32.totalorder %s19, 1
      %p149 = por %p147, %p148
      %p151 = scmp.ne.s32.totalorder %s134, %s150
      %p152 = scmp.eq.s32.totalorder %s19, 0
      %p153 = por %p151, %p152
      %p154 = scmp.le.s32.totalorder 1, %s13
      %p155 = scmp.lt.s32.totalorder %s13, 3
      %p156 = pnand %p154, %p155
      %p157 = pneg %p156
      // Predicated region
      $region9: #{tpu_custom_call.1} parent=5 // pred_check
        _
      $region10: #{tpu_custom_call.1} parent=5 // pred_check_branch
        %159 = sbr.rel (%p156) target = $region12
      $region11: #{tpu_custom_call.1} parent=5 // pred_region
        %s160 = ssub.s32 %s13, 1
        // Predicated region
        $region13: #{tpu_custom_call.1} parent=11 // pred_check
          %p161 = pneg %p88
        $region14: #{tpu_custom_call.1} parent=11 // pred_check_branch
          %163 = sbr.rel (%p161) target = $region16
        $region15: #{tpu_custom_call.1} parent=11 // pred_region
          %s165 = ssub.s32 1536, 1536
          %166 = vsyncadd [#allocation3], %s165
          %s167 = sadd.s32 %s23, %s24
          %s168 = smul.addr %s167, 128
          %s169 = scalar_lea.hbm %s1, %s168
          %s170 = sshll.u32 [#allocation2], 4
          %s171 = int_to_ptr.vmem [resolvable:$true] %s170
          %176 = dma.hbm_to_vmem [thread:$0]  %s169, 1536, %s171, [#allocation3], 128, 128, 8
        $region16: #{tpu_custom_call.1} parent=11 // pred_fallthru
          _
        // Predicated region
        $region17: #{tpu_custom_call.1} parent=11 // pred_check
          %p177 = pneg %p116
        $region18: #{tpu_custom_call.1} parent=11 // pred_check_branch
          %179 = sbr.rel (%p177) target = $region20
        $region19: #{tpu_custom_call.1} parent=11 // pred_region
          %p180 = scmp.lt.s32.totalorder %s24, 0
          %s181 = scalar_select %p180, %s24, 0
          %p182 = scmp.lt.s32.totalorder %s23, 0
          %s183 = scalar_select %p182, %s23, 0
          %s184 = sadd.s32 %s183, %s181
          %s185 = smul.addr %s184, 8
          %s186 = scalar_lea.vmem %s2, %s185
        $region20: #{tpu_custom_call.1} parent=11 // pred_fallthru
          _
      $region12: #{tpu_custom_call.1} parent=5 // pred_fallthru
        _
      %p187 = scmp.lt.s32.totalorder %s13, 2
      // Predicated region
      $region21: #{tpu_custom_call.1} parent=5 // pred_check
        %p188 = pneg %p187
      $region22: #{tpu_custom_call.1} parent=5 // pred_check_branch
        %190 = sbr.rel (%p188) target = $region24
      $region23: #{tpu_custom_call.1} parent=5 // pred_region
        // Predicated region
        $region25: #{tpu_custom_call.1} parent=23 // pred_check
          %p191 = pneg %p54
        $region26: #{tpu_custom_call.1} parent=23 // pred_check_branch
          %193 = sbr.rel (%p191) target = $region28
        $region27: #{tpu_custom_call.1} parent=23 // pred_region
          %p194 = scmp.lt.s32.totalorder %s22, 1
          %s195 = scalar_select %p194, %s22, 1
          %p196 = scmp.lt.s32.totalorder %s20, 0
          %s197 = scalar_select %p196, %s20, 0
          %s198 = smul.addr %s195, 2
          %s199 = sadd.s32 %s197, %s198
          %s200 = smul.addr %s199, 8
          %s201 = scalar_lea.vmem %s0, %s200
        $region28: #{tpu_custom_call.1} parent=23 // pred_fallthru
          _
      $region24: #{tpu_custom_call.1} parent=5 // pred_fallthru
        _
      %p202 = scmp.le.s32.totalorder 1, %s13
      %p203 = scmp.lt.s32.totalorder %s13, 3
      %p204 = pnand %p202, %p203
      %p205 = pneg %p204
      // Predicated region
      $region29: #{tpu_custom_call.1} parent=5 // pred_check
        _
      $region30: #{tpu_custom_call.1} parent=5 // pred_check_branch
        %207 = sbr.rel (%p204) target = $region32
      $region31: #{tpu_custom_call.1} parent=5 // pred_region
        %s208 = ssub.s32 %s13, 1
        // Predicated region
        $region33: #{tpu_custom_call.1} parent=31 // pred_check
          %p209 = pneg %p88
        $region34: #{tpu_custom_call.1} parent=31 // pred_check_branch
          %211 = sbr.rel (%p209) target = $region36
        $region35: #{tpu_custom_call.1} parent=31 // pred_region
          %212 = dma.done [#allocation3], 1536
        $region36: #{tpu_custom_call.1} parent=31 // pred_fallthru
          _
        %p213 = scmp.lt.s32.totalorder %s25, 1
        %s214 = scalar_select %p213, %s25, 1
        %p215 = scmp.lt.s32.totalorder %s23, 0
        %s216 = scalar_select %p215, %s23, 0
        %s217 = smul.addr %s214, 2
        %s218 = sadd.s32 %s216, %s217
        %s219 = smul.addr %s218, 8
        %s220 = scalar_lea.vmem %s0, %s219
        %p221 = pneg %p60
        %p222 = pneg %p57
        %p223 = pneg %p88
        %p224 = pneg %p85
        %p225 = scmp.lt.s32.totalorder %s24, 0
        %s226 = scalar_select %p225, %s24, 0
        %p227 = scmp.lt.s32.totalorder %s23, 0
        %s228 = scalar_select %p227, %s23, 0
        %s229 = sadd.s32 %s228, %s226
        %s230 = smul.addr %s229, 8
        %s231 = scalar_lea.vmem %s2, %s230
        %p232 = pneg %p116
        %p233 = pneg %p113
        %p234 = pneg %p146
        %p235 = pneg %p143
        %s236 = sand.u32 %s133, 1
        %s237 = scalar_lea.sflag [#allocation4], %s236
        %s238 = sand.u32 %s133, 1
        %s239 = smul.addr %s238, 8
        %s240 = scalar_lea.vmem [#allocation5], %s239
        %p241 = scmp.lt.s32.totalorder %s25, 1
        %s242 = scalar_select %p241, %s25, 1
        %p243 = scmp.lt.s32.totalorder %s23, 0
        %s244 = scalar_select %p243, %s23, 0
        %s245 = smul.addr %s242, 2
        %s246 = sadd.s32 %s244, %s245
        %s247 = smul.addr %s246, 8
        %s248 = scalar_lea.vmem %s0, %s247
        %p249 = scmp.lt.s32.totalorder %s24, 0
        %s250 = scalar_select %p249, %s24, 0
        %p251 = scmp.lt.s32.totalorder %s23, 0
        %s252 = scalar_select %p251, %s23, 0
        %s253 = sadd.s32 %s252, %s250
        %s254 = smul.addr %s253, 8
        %s255 = scalar_lea.vmem %s2, %s254
        %v256 = vld [vmem:[%s255] sm:$0xff]
        %v257 = vld [vmem:[#allocation2] sm:$0xff]
        %v258 = vld [vmem:[%s248] sm:$0x1]
        %v259 = vlaneseq
        %v260 = vshrl.u32 %v259, 7
        %v261 = vsub.s32 0, %v260
        %v262 = vrot.slane %v258, %v261
        %v263 = vmul.f32 %v257, %v262
        %v264 = vadd.f32 %v256, %v263
        %s265 = scalar_lea.vmem [#allocation2], 8
        %v266 = vld [vmem:[%s265] sm:$0xff]
        %v267 = vld [vmem:[%s248 + $0x1] sm:$0x1]
        %v268 = vlaneseq
        %v269 = vshrl.u32 %v268, 7
        %v270 = vsub.s32 0, %v269
        %v271 = vrot.slane %v267, %v270
        %v272 = vmul.f32 %v266, %v271
        %v273 = vadd.f32 %v264, %v272
        %s274 = scalar_lea.vmem [#allocation2], 16
        %v275 = vld [vmem:[%s274] sm:$0xff]
        %v276 = vld [vmem:[%s248 + $0x2] sm:$0x1]
        %v277 = vlaneseq
        %v278 = vshrl.u32 %v277, 7
        %v279 = vsub.s32 0, %v278
        %v280 = vrot.slane %v276, %v279
        %v281 = vmul.f32 %v275, %v280
        %v282 = vadd.f32 %v273, %v281
        %s283 = scalar_lea.vmem [#allocation2], 24
        %v284 = vld [vmem:[%s283] sm:$0xff]
        %v285 = vld [vmem:[%s248 + $0x3] sm:$0x1]
        %v286 = vlaneseq
        %v287 = vshrl.u32 %v286, 7
        %v288 = vsub.s32 0, %v287
        %v289 = vrot.slane %v285, %v288
        %v290 = vmul.f32 %v284, %v289
        %v291 = vadd.f32 %v282, %v290
        %s292 = scalar_lea.vmem [#allocation2], 32
        %v293 = vld [vmem:[%s292] sm:$0xff]
        %v294 = vld [vmem:[%s248 + $0x4] sm:$0x1]
        %v295 = vlaneseq
        %v296 = vshrl.u32 %v295, 7
        %v297 = vsub.s32 0, %v296
        %v298 = vrot.slane %v294, %v297
        %v299 = vmul.f32 %v293, %v298
        %v300 = vadd.f32 %v291, %v299
        %s301 = scalar_lea.vmem [#allocation2], 40
        %v302 = vld [vmem:[%s301] sm:$0xff]
        %v303 = vld [vmem:[%s248 + $0x5] sm:$0x1]
        %v304 = vlaneseq
        %v305 = vshrl.u32 %v304, 7
        %v306 = vsub.s32 0, %v305
        %v307 = vrot.slane %v303, %v306
        %v308 = vmul.f32 %v302, %v307
        %v309 = vadd.f32 %v300, %v308
        %s310 = scalar_lea.vmem [#allocation2], 48
        %v311 = vld [vmem:[%s310] sm:$0xff]
        %v312 = vld [vmem:[%s248 + $0x6] sm:$0x1]
        %v313 = vlaneseq
        %v314 = vshrl.u32 %v313, 7
        %v315 = vsub.s32 0, %v314
        %v316 = vrot.slane %v312, %v315
        %v317 = vmul.f32 %v311, %v316
        %v318 = vadd.f32 %v309, %v317
        %s319 = scalar_lea.vmem [#allocation2], 56
        %v320 = vld [vmem:[%s319] sm:$0xff]
        %v321 = vld [vmem:[%s248 + $0x7] sm:$0x1]
        %v322 = vlaneseq
        %v323 = vshrl.u32 %v322, 7
        %v324 = vsub.s32 0, %v323
        %v325 = vrot.slane %v321, %v324
        %v326 = vmul.f32 %v320, %v325
        %v327 = vadd.f32 %v318, %v326
        %s328 = scalar_lea.vmem [#allocation2], 64
        %v329 = vld [vmem:[%s328] sm:$0xff]
        %v330 = vld [vmem:[%s248 + $0x8] sm:$0x1]
        %v331 = vlaneseq
        %v332 = vshrl.u32 %v331, 7
        %v333 = vsub.s32 0, %v332
        %v334 = vrot.slane %v330, %v333
        %v335 = vmul.f32 %v329, %v334
        %v336 = vadd.f32 %v327, %v335
        %s337 = scalar_lea.vmem [#allocation2], 72
        %v338 = vld [vmem:[%s337] sm:$0xff]
        %v339 = vld [vmem:[%s248 + $0x9] sm:$0x1]
        %v340 = vlaneseq
        %v341 = vshrl.u32 %v340, 7
        %v342 = vsub.s32 0, %v341
        %v343 = vrot.slane %v339, %v342
        %v344 = vmul.f32 %v338, %v343
        %v345 = vadd.f32 %v336, %v344
        %s346 = scalar_lea.vmem [#allocation2], 80
        %v347 = vld [vmem:[%s346] sm:$0xff]
        %v348 = vld [vmem:[%s248 + $0xa] sm:$0x1]
        %v349 = vlaneseq
        %v350 = vshrl.u32 %v349, 7
        %v351 = vsub.s32 0, %v350
        %v352 = vrot.slane %v348, %v351
        %v353 = vmul.f32 %v347, %v352
        %v354 = vadd.f32 %v345, %v353
        %s355 = scalar_lea.vmem [#allocation2], 88
        %v356 = vld [vmem:[%s355] sm:$0xff]
        %v357 = vld [vmem:[%s248 + $0xb] sm:$0x1]
        %v358 = vlaneseq
        %v359 = vshrl.u32 %v358, 7
        %v360 = vsub.s32 0, %v359
        %v361 = vrot.slane %v357, %v360
        %v362 = vmul.f32 %v356, %v361
        %v363 = vadd.f32 %v354, %v362
        %364 = vst [vmem:[%s240] sm:$0xff] %v363
        %s365 = sand.u32 %s133, 1
        %s366 = scalar_lea.sflag [#allocation4], %s365
        %s367 = sand.u32 %s133, 1
        %s368 = smul.addr %s367, 8
        %s369 = scalar_lea.vmem [#allocation5], %s368
        // Predicated region
        $region37: #{tpu_custom_call.1} parent=31 // pred_check
          %p370 = pneg %p143
        $region38: #{tpu_custom_call.1} parent=31 // pred_check_branch
          %372 = sbr.rel (%p370) target = $region40
        $region39: #{tpu_custom_call.1} parent=31 // pred_region
          %s374 = ssub.s32 128, 128
          %375 = vsyncadd %s366, %s374
          %s376 = sadd.s32 %s23, %s24
          %s377 = sadd.s32 %s376, %s25
          %s378 = smul.addr %s377, 128
          %s379 = scalar_lea.hbm %s3, %s378
          %s381 = sshll.u32 %s369, 4
          %s382 = int_to_ptr.vmem [resolvable:$true] %s381
          %384 = dma.vmem_to_hbm [thread:$0]  %s382, 128, %s379, %s366
        $region40: #{tpu_custom_call.1} parent=31 // pred_fallthru
          _
      $region32: #{tpu_custom_call.1} parent=5 // pred_fallthru
        _
      %p385 = scmp.le.s32.totalorder 2, %s13
      // Predicated region
      $region41: #{tpu_custom_call.1} parent=5 // pred_check
        %p386 = pneg %p385
      $region42: #{tpu_custom_call.1} parent=5 // pred_check_branch
        %388 = sbr.rel (%p386) target = $region44
      $region43: #{tpu_custom_call.1} parent=5 // pred_region
        %s389 = ssub.s32 %s13, 2
        // Predicated region
        $region45: #{tpu_custom_call.1} parent=43 // pred_check
          %p390 = pneg %p149
        $region46: #{tpu_custom_call.1} parent=43 // pred_check_branch
          %392 = sbr.rel (%p390) target = $region48
        $region47: #{tpu_custom_call.1} parent=43 // pred_region
          %s393 = sand.u32 %s134, 1
          %s394 = scalar_lea.sflag [#allocation4], %s393
          %s395 = sand.u32 %s134, 1
          %s396 = smul.addr %s395, 8
          %s397 = scalar_lea.vmem [#allocation5], %s396
          %398 = dma.done %s394, 128
        $region48: #{tpu_custom_call.1} parent=43 // pred_fallthru
          _
      $region44: #{tpu_custom_call.1} parent=5 // pred_fallthru
        _
    $region6: #{tpu_custom_call.1} parent=1 // loop_footer
      %s17 = sadd.s32 1, %s13
    $region7: #{tpu_custom_call.1} parent=1 // loop_footer_branch
      %12 = sbr.rel target = $region3
    $region8: #{tpu_custom_call.1} parent=1 // loop_exit
      _
    %399 = vsyncpa [#allocation3], 1
    %s400 = scalar_lea.sflag [#allocation3], 1
    %401 = vsyncpa %s400, 1
    %402 = vsyncpa [#allocation4], 1
    %s403 = scalar_lea.sflag [#allocation4], 1
    %404 = vsyncpa %s403, 1

</llo_original>
